<compile_context>
chip_gen: v7x
topology: tpu7x:2x2x1
jax: 0.10.0
libtpu: 0.0.40
codegen_flags: <defaults>
</compile_context>

<pallas_src>
import jax
import jax.numpy as jnp
from jax.experimental import pallas as pl
from jax.experimental.pallas import tpu as pltpu

NUM_LAYERS = 2          # hidden Linear(C, C) layers
C = 64                  # num_mlp_channels
DIM_IN = 3
DIM_OUT = 3             # dim_out (global in the original script); chosen = 3
DIM_OUT_PAD = 8         # output rows padded to a full sublane group
MAX_TILE_N = 8192       # max points (lanes) per grid step, multiple of 128


def mlp_kernel(xT_ref, w0T_ref, b0T_ref, whT_ref, bhT_ref, woT_ref, boT_ref, o_ref):
    xT = xT_ref[...]           # (DIM_IN, T) f32
    w0T = w0T_ref[...]         # (C, DIM_IN) f32

    # Input layer on the VPU: h^T[c, t] = sum_k W0[k, c] * x[t, k]   (K = 3).
    h = jnp.maximum(
        w0T[:, 0:1] * xT[0:1, :]
        + w0T[:, 1:2] * xT[1:2, :]
        + w0T[:, 2:3] * xT[2:3, :]
        + b0T_ref[...],
        0.0)                                            # (C, T) f32
    hb = h.astype(jnp.bfloat16)

    # Hidden layers: bf16 MXU matmuls, f32 accumulation, f32 bias/ReLU,
    # activations carried in bf16.
    for l in range(NUM_LAYERS):
        acc = jnp.dot(whT_ref[l], hb, preferred_element_type=jnp.float32)  # (C, T)
        hb = jnp.maximum(acc + bhT_ref[l], 0.0).astype(jnp.bfloat16)

    # Output layer (rows padded to DIM_OUT_PAD with zero weight/bias; ReLU matches
    # the PyTorch module, padded rows come out exactly zero and are sliced off).
    out = jnp.maximum(
        jnp.dot(woT_ref[...], hb, preferred_element_type=jnp.float32)
        + boT_ref[...],
        0.0)                                            # (DIM_OUT_PAD, T) f32
    o_ref[...] = out.astype(o_ref.dtype)


def _round_up(n, m):
    return ((n + m - 1) // m) * m


def simple_mlp_forward(x, params):
    """x: (N, DIM_IN) float32. params: list of (W (fan_in, fan_out), b (1, fan_out)) f32."""
    N = x.shape[0]
    (w0, b0), *hidden, (wo, bo) = params

    # Feature-major (transposed) packing; first layer stays f32 (VPU path),
    # hidden/output weights go bf16 for the MXU, biases stay f32.
    w0T = w0.T                                                          # (C, DIM_IN)
    b0T = b0.T                                                          # (C, 1)
    whT = jnp.stack([w.T.astype(jnp.bfloat16) for (w, _) in hidden])    # (L, C, C)
    bhT = jnp.stack([b.T for (_, b) in hidden])                         # (L, C, 1)
    woT = jnp.zeros((DIM_OUT_PAD, C), jnp.float32).at[:DIM_OUT].set(wo.T)
    woT = woT.astype(jnp.bfloat16)                                      # (8, C)
    boT = jnp.zeros((DIM_OUT_PAD, 1), jnp.float32).at[:DIM_OUT].set(bo.T)

    # Lane-pad the batch to a multiple of 128 and tile it; single grid step when
    # it fits (extra steps are pure overhead on single-TC chips).
    n128 = _round_up(N, 128)
    tile_n = min(n128, MAX_TILE_N)
    n_grid = pl.cdiv(n128, tile_n)
    n_pad = n_grid * tile_n

    xT = x.T                                                            # (DIM_IN, N)
    if n_pad != N:
        xT = jnp.pad(xT, ((0, 0), (0, n_pad - N)))

    full2 = lambda a: pl.BlockSpec(a.shape, lambda i: (0, 0))
    full3 = lambda a: pl.BlockSpec(a.shape, lambda i: (0, 0, 0))

    outT = pl.pallas_call(
        mlp_kernel,
        out_shape=jax.ShapeDtypeStruct((DIM_OUT_PAD, n_pad), jnp.float32),
        grid_spec=pltpu.PrefetchScalarGridSpec(
            num_scalar_prefetch=0,
            grid=(n_grid,),
            in_specs=[
                pl.BlockSpec((DIM_IN, tile_n), lambda i: (0, i)),       # x^T tile
                full2(w0T), full2(b0T),                                 # input layer
                full3(whT), full3(bhT),                                 # hidden layers
                full2(woT), full2(boT),                                 # output layer
            ],
            out_specs=pl.BlockSpec((DIM_OUT_PAD, tile_n), lambda i: (0, i)),
        ),
        compiler_params=pltpu.CompilerParams(
            dimension_semantics=("parallel",)),
    )(xT, w0T, b0T, whT, bhT, woT, boT)

    return outT[:DIM_OUT, :N].T


def init_params(key):
    """Deterministic init mimicking torch.nn.Linear default:
    U(-1/sqrt(fan_in), 1/sqrt(fan_in)) for both weight and bias."""
    dims = [(DIM_IN, C)] + [(C, C)] * NUM_LAYERS + [(C, DIM_OUT)]
    params = []
    for (fan_in, fan_out) in dims:
        key, kw, kb = jax.random.split(key, 3)
        bound = 1.0 / jnp.sqrt(float(fan_in))
        W = jax.random.uniform(kw, (fan_in, fan_out), jnp.float32,
                               minval=-bound, maxval=bound)
        b = jax.random.uniform(kb, (1, fan_out), jnp.float32,
                               minval=-bound, maxval=bound)
        params.append((W, b))
    return params


def reference_forward(x, params):
    h = x
    for (W, b) in params:
        h = jnp.maximum(h @ W + b, 0.0)
    return h


if __name__ == "__main__":
    key = jax.random.PRNGKey(0)
    key, kx = jax.random.split(key)

    N = 200  # small synthetic batch of 3-D points (exercises the ragged-N padding)
    x = jax.random.normal(kx, (N, DIM_IN), dtype=jnp.float32)
    params = init_params(key)

    out = simple_mlp_forward(x, params)
    out = jax.block_until_ready(out)

    ref = reference_forward(x, params)
    assert out.shape == (N, DIM_OUT), out.shape
    # Hidden/output matmuls run in bf16 (f32 accumulate): relaxed tolerance.
    assert jnp.allclose(out, ref, atol=3e-2, rtol=3e-2), "mismatch vs reference"

    print("KERNEL_OK")
</pallas_src>

<mosaic_0001>
module attributes {stable_mosaic.version = 11 : i64} {
  func.func @mlp_kernel(%arg0: i32, %arg1: memref<3x256xf32, #tpu.memory_space<vmem>>, %arg2: memref<64x3xf32, #tpu.memory_space<vmem>>, %arg3: memref<64x1xf32, #tpu.memory_space<vmem>>, %arg4: memref<2x64x64xbf16, #tpu.memory_space<vmem>>, %arg5: memref<2x64x1xf32, #tpu.memory_space<vmem>>, %arg6: memref<8x64xbf16, #tpu.memory_space<vmem>>, %arg7: memref<8x1xf32, #tpu.memory_space<vmem>>, %arg8: memref<8x256xf32, #tpu.memory_space<vmem>>) attributes {dimension_semantics = [#tpu.dimension_semantics<parallel>], iteration_bounds = array<i64: 1>, scalar_prefetch = 0 : i64, scratch_operands = 0 : i64, tpu.core_type = #tpu.core_type<tc>, window_params = [{transform_indices = @transform_0, window_bounds = array<i64: 3, 256>}, {pipeline_mode = #tpu.pipeline_mode<synchronous>, transform_indices = @transform_1, window_bounds = array<i64: 64, 3>}, {pipeline_mode = #tpu.pipeline_mode<synchronous>, transform_indices = @transform_2, window_bounds = array<i64: 64, 1>}, {pipeline_mode = #tpu.pipeline_mode<synchronous>, transform_indices = @transform_3, window_bounds = array<i64: 2, 64, 64>}, {pipeline_mode = #tpu.pipeline_mode<synchronous>, transform_indices = @transform_4, window_bounds = array<i64: 2, 64, 1>}, {pipeline_mode = #tpu.pipeline_mode<synchronous>, transform_indices = @transform_5, window_bounds = array<i64: 8, 64>}, {pipeline_mode = #tpu.pipeline_mode<synchronous>, transform_indices = @transform_6, window_bounds = array<i64: 8, 1>}, {transform_indices = @transform_7, window_bounds = array<i64: 8, 256>}]} {
    %c0 = arith.constant 0 : index
    %c0_0 = arith.constant 0 : index
    %0 = vector.load %arg1[%c0, %c0_0] : memref<3x256xf32, #tpu.memory_space<vmem>>, vector<3x256xf32>
    %c0_1 = arith.constant 0 : index
    %c0_2 = arith.constant 0 : index
    %1 = vector.load %arg2[%c0_1, %c0_2] : memref<64x3xf32, #tpu.memory_space<vmem>>, vector<64x3xf32>
    %2 = vector.extract_strided_slice %1 {offsets = [0, 0], sizes = [64, 1], strides = [1, 1]} : vector<64x3xf32> to vector<64x1xf32>
    %3 = vector.extract_strided_slice %0 {offsets = [0, 0], sizes = [1, 256], strides = [1, 1]} : vector<3x256xf32> to vector<1x256xf32>
    %4 = vector.broadcast %2 : vector<64x1xf32> to vector<64x256xf32>
    %5 = vector.broadcast %3 : vector<1x256xf32> to vector<64x256xf32>
    %6 = arith.mulf %4, %5 : vector<64x256xf32>
    %7 = vector.extract_strided_slice %1 {offsets = [0, 1], sizes = [64, 1], strides = [1, 1]} : vector<64x3xf32> to vector<64x1xf32>
    %8 = vector.extract_strided_slice %0 {offsets = [1, 0], sizes = [1, 256], strides = [1, 1]} : vector<3x256xf32> to vector<1x256xf32>
    %9 = vector.broadcast %7 : vector<64x1xf32> to vector<64x256xf32>
    %10 = vector.broadcast %8 : vector<1x256xf32> to vector<64x256xf32>
    %11 = arith.mulf %9, %10 : vector<64x256xf32>
    %12 = arith.addf %6, %11 : vector<64x256xf32>
    %13 = vector.extract_strided_slice %1 {offsets = [0, 2], sizes = [64, 1], strides = [1, 1]} : vector<64x3xf32> to vector<64x1xf32>
    %14 = vector.extract_strided_slice %0 {offsets = [2, 0], sizes = [1, 256], strides = [1, 1]} : vector<3x256xf32> to vector<1x256xf32>
    %15 = vector.broadcast %13 : vector<64x1xf32> to vector<64x256xf32>
    %16 = vector.broadcast %14 : vector<1x256xf32> to vector<64x256xf32>
    %17 = arith.mulf %15, %16 : vector<64x256xf32>
    %18 = arith.addf %12, %17 : vector<64x256xf32>
    %c0_3 = arith.constant 0 : index
    %c0_4 = arith.constant 0 : index
    %19 = vector.load %arg3[%c0_3, %c0_4] : memref<64x1xf32, #tpu.memory_space<vmem>>, vector<64x1xf32>
    %20 = vector.broadcast %19 : vector<64x1xf32> to vector<64x256xf32>
    %21 = arith.addf %18, %20 : vector<64x256xf32>
    %cst = arith.constant 0.000000e+00 : f32
    %22 = vector.broadcast %cst : f32 to vector<64x256xf32>
    %23 = arith.maximumf %21, %22 : vector<64x256xf32>
    %24 = arith.truncf %23 : vector<64x256xf32> to vector<64x256xbf16>
    %c0_5 = arith.constant 0 : index
    %c0_6 = arith.constant 0 : index
    %c0_7 = arith.constant 0 : index
    %25 = vector.load %arg4[%c0_5, %c0_6, %c0_7] : memref<2x64x64xbf16, #tpu.memory_space<vmem>>, vector<1x64x64xbf16>
    %26 = vector.shape_cast %25 : vector<1x64x64xbf16> to vector<64x64xbf16>
    %cst_8 = arith.constant dense<0.000000e+00> : vector<64x256xf32>
    %27 = tpu.matmul %26, %24, %cst_8 {dimension_numbers = #tpu.dot_dimension_numbers<[1], [0], [0], [1], [0, 0, 1, 1], [], []>} : vector<64x64xbf16>, vector<64x256xbf16>, vector<64x256xf32> -> vector<64x256xf32>
    %c0_9 = arith.constant 0 : index
    %c0_10 = arith.constant 0 : index
    %c0_11 = arith.constant 0 : index
    %28 = vector.load %arg5[%c0_9, %c0_10, %c0_11] : memref<2x64x1xf32, #tpu.memory_space<vmem>>, vector<1x64x1xf32>
    %29 = vector.shape_cast %28 : vector<1x64x1xf32> to vector<64x1xf32>
    %30 = vector.broadcast %29 : vector<64x1xf32> to vector<64x256xf32>
    %31 = arith.addf %27, %30 : vector<64x256xf32>
    %cst_12 = arith.constant 0.000000e+00 : f32
    %32 = vector.broadcast %cst_12 : f32 to vector<64x256xf32>
    %33 = arith.maximumf %31, %32 : vector<64x256xf32>
    %34 = arith.truncf %33 : vector<64x256xf32> to vector<64x256xbf16>
    %c1 = arith.constant 1 : index
    %c0_13 = arith.constant 0 : index
    %c0_14 = arith.constant 0 : index
    %35 = vector.load %arg4[%c1, %c0_13, %c0_14] : memref<2x64x64xbf16, #tpu.memory_space<vmem>>, vector<1x64x64xbf16>
    %36 = vector.shape_cast %35 : vector<1x64x64xbf16> to vector<64x64xbf16>
    %cst_15 = arith.constant dense<0.000000e+00> : vector<64x256xf32>
    %37 = tpu.matmul %36, %34, %cst_15 {dimension_numbers = #tpu.dot_dimension_numbers<[1], [0], [0], [1], [0, 0, 1, 1], [], []>} : vector<64x64xbf16>, vector<64x256xbf16>, vector<64x256xf32> -> vector<64x256xf32>
    %c1_16 = arith.constant 1 : index
    %c0_17 = arith.constant 0 : index
    %c0_18 = arith.constant 0 : index
    %38 = vector.load %arg5[%c1_16, %c0_17, %c0_18] : memref<2x64x1xf32, #tpu.memory_space<vmem>>, vector<1x64x1xf32>
    %39 = vector.shape_cast %38 : vector<1x64x1xf32> to vector<64x1xf32>
    %40 = vector.broadcast %39 : vector<64x1xf32> to vector<64x256xf32>
    %41 = arith.addf %37, %40 : vector<64x256xf32>
    %cst_19 = arith.constant 0.000000e+00 : f32
    %42 = vector.broadcast %cst_19 : f32 to vector<64x256xf32>
    %43 = arith.maximumf %41, %42 : vector<64x256xf32>
    %44 = arith.truncf %43 : vector<64x256xf32> to vector<64x256xbf16>
    %c0_20 = arith.constant 0 : index
    %c0_21 = arith.constant 0 : index
    %45 = vector.load %arg6[%c0_20, %c0_21] : memref<8x64xbf16, #tpu.memory_space<vmem>>, vector<8x64xbf16>
    %cst_22 = arith.constant dense<0.000000e+00> : vector<8x256xf32>
    %46 = tpu.matmul %45, %44, %cst_22 {dimension_numbers = #tpu.dot_dimension_numbers<[1], [0], [0], [1], [0, 0, 1, 1], [], []>} : vector<8x64xbf16>, vector<64x256xbf16>, vector<8x256xf32> -> vector<8x256xf32>
    %c0_23 = arith.constant 0 : index
    %c0_24 = arith.constant 0 : index
    %47 = vector.load %arg7[%c0_23, %c0_24] : memref<8x1xf32, #tpu.memory_space<vmem>>, vector<8x1xf32>
    %48 = vector.broadcast %47 : vector<8x1xf32> to vector<8x256xf32>
    %49 = arith.addf %46, %48 : vector<8x256xf32>
    %cst_25 = arith.constant 0.000000e+00 : f32
    %50 = vector.broadcast %cst_25 : f32 to vector<8x256xf32>
    %51 = arith.maximumf %49, %50 : vector<8x256xf32>
    %c0_26 = arith.constant 0 : index
    %c0_27 = arith.constant 0 : index
    %52 = vector.load %arg8[%c0_26, %c0_27] : memref<8x256xf32, #tpu.memory_space<vmem>>, vector<8x256xf32>
    tpu.vector_store %arg8[%c0_26, %c0_27], %51 {strides = array<i32>} : memref<8x256xf32, #tpu.memory_space<vmem>>, vector<8x256xf32>,
    return
  }
  func.func @transform_0(%arg0: i32) -> (i32, i32) {
    %c0_i32 = arith.constant 0 : i32
    %c0_i32_0 = arith.constant 0 : i32
    return %c0_i32, %arg0 : i32, i32
  }
  func.func @transform_1(%arg0: i32) -> (i32, i32) {
    %c0_i32 = arith.constant 0 : i32
    %c0_i32_0 = arith.constant 0 : i32
    %c0_i32_1 = arith.constant 0 : i32
    return %c0_i32, %c0_i32_0 : i32, i32
  }
  func.func @transform_2(%arg0: i32) -> (i32, i32) {
    %c0_i32 = arith.constant 0 : i32
    %c0_i32_0 = arith.constant 0 : i32
    %c0_i32_1 = arith.constant 0 : i32
    return %c0_i32, %c0_i32_0 : i32, i32
  }
  func.func @transform_3(%arg0: i32) -> (i32, i32, i32) {
    %c0_i32 = arith.constant 0 : i32
    %c0_i32_0 = arith.constant 0 : i32
    %c0_i32_1 = arith.constant 0 : i32
    %c0_i32_2 = arith.constant 0 : i32
    return %c0_i32, %c0_i32_0, %c0_i32_1 : i32, i32, i32
  }
  func.func @transform_4(%arg0: i32) -> (i32, i32, i32) {
    %c0_i32 = arith.constant 0 : i32
    %c0_i32_0 = arith.constant 0 : i32
    %c0_i32_1 = arith.constant 0 : i32
    %c0_i32_2 = arith.constant 0 : i32
    return %c0_i32, %c0_i32_0, %c0_i32_1 : i32, i32, i32
  }
  func.func @transform_5(%arg0: i32) -> (i32, i32) {
    %c0_i32 = arith.constant 0 : i32
    %c0_i32_0 = arith.constant 0 : i32
    %c0_i32_1 = arith.constant 0 : i32
    return %c0_i32, %c0_i32_0 : i32, i32
  }
  func.func @transform_6(%arg0: i32) -> (i32, i32) {
    %c0_i32 = arith.constant 0 : i32
    %c0_i32_0 = arith.constant 0 : i32
    %c0_i32_1 = arith.constant 0 : i32
    return %c0_i32, %c0_i32_0 : i32, i32
  }
  func.func @transform_7(%arg0: i32) -> (i32, i32) {
    %c0_i32 = arith.constant 0 : i32
    %c0_i32_0 = arith.constant 0 : i32
    return %c0_i32, %arg0 : i32, i32
  }
}

</mosaic_0001>

<llo_original>
// kernel: tpu_custom_call.1
$region0: #{tpu_custom_call.1}
  #allocation0 [shape = 'u32[]', space=smem, size = 0x4, offset = 0x4, fixed_abs, tag = 'smem constant byte address 0x4 - core index']
  #allocation1 [shape = 'u32[144,128]{1,0:T(1,128)}', space=vmem, size = 0x12000, scoped, tag = 'internal scratch']
  %s0 = inlined_call_operand.vmem [shape: f32[3,256], index: 0, kind: input, shape index: {}]
  %s1 = inlined_call_operand.vmem [shape: f32[64,3], index: 1, kind: input, shape index: {}]
  %s2 = inlined_call_operand.vmem [shape: f32[64,1], index: 2, kind: input, shape index: {}]
  %s3 = inlined_call_operand.vmem [shape: bf16[2,64,64], index: 3, kind: input, shape index: {}]
  %s4 = inlined_call_operand.vmem [shape: f32[2,64,1], index: 4, kind: input, shape index: {}]
  %s5 = inlined_call_operand.vmem [shape: bf16[8,64], index: 5, kind: input, shape index: {}]
  %s6 = inlined_call_operand.vmem [shape: f32[8,1], index: 6, kind: input, shape index: {}]
  %s7 = inlined_call_operand.hbm [shape: f32[8,256], index: 7, kind: output, shape index: {}]
  %s8 = sld [smem:[#allocation0]]
  $region38: #{tpu_custom_call.1} parent=0
    _
  %s10 = ssub.s32 1, %s8
  %s11 = scalar_select 0, %s10, %s8
  $region1: #{tpu_custom_call.1} parent=0
    #allocation2 [shape = 'u8[8192]{0}', space=vmem, size = 0x2000, scoped, tag = 'output window, operand 0, single buffered']
    #allocation3 [shape = 's32[1]{0}', space=sflag, size = 0x4, scoped, tag = 'scoped memory for tpu_custom_call.1']
    %12 = vsyncpa [#allocation3], 0
    // Predicated region
    $region2: #{tpu_custom_call.1} parent=1 // pred_check
      _
    $region3: #{tpu_custom_call.1} parent=1 // pred_check_branch
      %14 = sbr.rel (0) target = $region5
    $region4: #{tpu_custom_call.1} parent=1 // pred_region
      _
    $region5: #{tpu_custom_call.1} parent=1 // pred_fallthru
      _
    // Predicated region
    $region6: #{tpu_custom_call.1} parent=1 // pred_check
      _
    $region7: #{tpu_custom_call.1} parent=1 // pred_check_branch
      %16 = sbr.rel (0) target = $region9
    $region8: #{tpu_custom_call.1} parent=1 // pred_region
      _
    $region9: #{tpu_custom_call.1} parent=1 // pred_fallthru
      _
    // Predicated region
    $region10: #{tpu_custom_call.1} parent=1 // pred_check
      _
    $region11: #{tpu_custom_call.1} parent=1 // pred_check_branch
      %18 = sbr.rel (0) target = $region13
    $region12: #{tpu_custom_call.1} parent=1 // pred_region
      _
    $region13: #{tpu_custom_call.1} parent=1 // pred_fallthru
      _
    // Predicated region
    $region14: #{tpu_custom_call.1} parent=1 // pred_check
      _
    $region15: #{tpu_custom_call.1} parent=1 // pred_check_branch
      %20 = sbr.rel (0) target = $region17
    $region16: #{tpu_custom_call.1} parent=1 // pred_region
      _
    $region17: #{tpu_custom_call.1} parent=1 // pred_fallthru
      _
    // Predicated region
    $region18: #{tpu_custom_call.1} parent=1 // pred_check
      _
    $region19: #{tpu_custom_call.1} parent=1 // pred_check_branch
      %22 = sbr.rel (0) target = $region21
    $region20: #{tpu_custom_call.1} parent=1 // pred_region
      _
    $region21: #{tpu_custom_call.1} parent=1 // pred_fallthru
      _
    // Predicated region
    $region22: #{tpu_custom_call.1} parent=1 // pred_check
      _
    $region23: #{tpu_custom_call.1} parent=1 // pred_check_branch
      %24 = sbr.rel (0) target = $region25
    $region24: #{tpu_custom_call.1} parent=1 // pred_region
      _
    $region25: #{tpu_custom_call.1} parent=1 // pred_fallthru
      _
    // Predicated region
    $region26: #{tpu_custom_call.1} parent=1 // pred_check
      _
    $region27: #{tpu_custom_call.1} parent=1 // pred_check_branch
      %26 = sbr.rel (0) target = $region29
    $region28: #{tpu_custom_call.1} parent=1 // pred_region
      _
    $region29: #{tpu_custom_call.1} parent=1 // pred_fallthru
      _
    %v28 = vld [vmem:[%s0] sm:$0x77]
    %v29 = vld [vmem:[%s1] sm:$0xff]
    %v30 = vld [vmem:[%s1 + $0x8] sm:$0xff]
    %v31 = vld [vmem:[%s1 + $0x10] sm:$0xff]
    %v32 = vld [vmem:[%s1 + $0x18] sm:$0xff]
    %v33 = vld [vmem:[%s1 + $0x20] sm:$0xff]
    %v34 = vld [vmem:[%s1 + $0x28] sm:$0xff]
    %v35 = vld [vmem:[%s1 + $0x30] sm:$0xff]
    %v36 = vld [vmem:[%s1 + $0x38] sm:$0xff]
    %38 = vset.pattern.permute.xlu0 0
    %39 = vperm.xlu0 %38, %v29
    %v40 = vpop.permute.xlu0 %39
    %43 = vset.pattern.permute.xlu0 0
    %44 = vperm.xlu0 %43, %v30
    %v45 = vpop.permute.xlu0 %44
    %48 = vset.pattern.permute.xlu0 0
    %49 = vperm.xlu0 %48, %v31
    %v50 = vpop.permute.xlu0 %49
    %53 = vset.pattern.permute.xlu0 0
    %54 = vperm.xlu0 %53, %v32
    %v55 = vpop.permute.xlu0 %54
    %58 = vset.pattern.permute.xlu0 0
    %59 = vperm.xlu0 %58, %v33
    %v60 = vpop.permute.xlu0 %59
    %63 = vset.pattern.permute.xlu0 0
    %64 = vperm.xlu0 %63, %v34
    %v65 = vpop.permute.xlu0 %64
    %68 = vset.pattern.permute.xlu0 0
    %69 = vperm.xlu0 %68, %v35
    %v70 = vpop.permute.xlu0 %69
    %73 = vset.pattern.permute.xlu0 0
    %74 = vperm.xlu0 %73, %v36
    %v75 = vpop.permute.xlu0 %74
    %v78 = vlaneseq
    %v79 = vshrl.u32 %v78, 7
    %v80 = vsub.s32 0, %v79
    %v81 = vrot.slane %v28, %v80
    %v82 = vlaneseq
    %v83 = vshrl.u32 %v82, 7
    %v84 = vsub.s32 4, %v83
    %v85 = vrot.slane %v28, %v84
    %v88 = vlaneseq
    %v89 = vshrl.u32 %v88, 7
    %v90 = vsub.s32 0, %v89
    %v91 = vrot.slane %v81, %v90
    %v92 = vlaneseq
    %v93 = vshrl.u32 %v92, 7
    %v94 = vsub.s32 0, %v93
    %v95 = vrot.slane %v85, %v94
    %v96 = vmul.f32 %v40, %v91
    %v97 = vmul.f32 %v40, %v95
    %v98 = vmul.f32 %v45, %v91
    %v99 = vmul.f32 %v45, %v95
    %v100 = vmul.f32 %v50, %v91
    %v101 = vmul.f32 %v50, %v95
    %v102 = vmul.f32 %v55, %v91
    %v103 = vmul.f32 %v55, %v95
    %v104 = vmul.f32 %v60, %v91
    %v105 = vmul.f32 %v60, %v95
    %v106 = vmul.f32 %v65, %v91
    %v107 = vmul.f32 %v65, %v95
    %v108 = vmul.f32 %v70, %v91
    %v109 = vmul.f32 %v70, %v95
    %v110 = vmul.f32 %v75, %v91
    %v111 = vmul.f32 %v75, %v95
    %112 = vset.pattern.permute.xlu0 1
    %113 = vperm.xlu0 %112, %v29
    %v114 = vpop.permute.xlu0 %113
    %116 = vset.pattern.permute.xlu0 1
    %117 = vperm.xlu0 %116, %v30
    %v118 = vpop.permute.xlu0 %117
    %120 = vset.pattern.permute.xlu0 1
    %121 = vperm.xlu0 %120, %v31
    %v122 = vpop.permute.xlu0 %121
    %124 = vset.pattern.permute.xlu0 1
    %125 = vperm.xlu0 %124, %v32
    %v126 = vpop.permute.xlu0 %125
    %128 = vset.pattern.permute.xlu0 1
    %129 = vperm.xlu0 %128, %v33
    %v130 = vpop.permute.xlu0 %129
    %132 = vset.pattern.permute.xlu0 1
    %133 = vperm.xlu0 %132, %v34
    %v134 = vpop.permute.xlu0 %133
    %136 = vset.pattern.permute.xlu0 1
    %137 = vperm.xlu0 %136, %v35
    %v138 = vpop.permute.xlu0 %137
    %140 = vset.pattern.permute.xlu0 1
    %141 = vperm.xlu0 %140, %v36
    %v142 = vpop.permute.xlu0 %141
    %v144 = vlaneseq
    %v145 = vshrl.u32 %v144, 7
    %v146 = vsub.s32 1, %v145
    %v147 = vrot.slane %v28, %v146
    %v148 = vlaneseq
    %v149 = vshrl.u32 %v148, 7
    %v150 = vsub.s32 5, %v149
    %v151 = vrot.slane %v28, %v150
    %v154 = vlaneseq
    %v155 = vshrl.u32 %v154, 7
    %v156 = vsub.s32 1, %v155
    %v157 = vrot.slane %v147, %v156
    %v158 = vlaneseq
    %v159 = vshrl.u32 %v158, 7
    %v160 = vsub.s32 1, %v159
    %v161 = vrot.slane %v151, %v160
    %v162 = vmul.f32 %v114, %v157
    %v163 = vmul.f32 %v114, %v161
    %v164 = vmul.f32 %v118, %v157
    %v165 = vmul.f32 %v118, %v161
    %v166 = vmul.f32 %v122, %v157
    %v167 = vmul.f32 %v122, %v161
    %v168 = vmul.f32 %v126, %v157
    %v169 = vmul.f32 %v126, %v161
    %v170 = vmul.f32 %v130, %v157
    %v171 = vmul.f32 %v130, %v161
    %v172 = vmul.f32 %v134, %v157
    %v173 = vmul.f32 %v134, %v161
    %v174 = vmul.f32 %v138, %v157
    %v175 = vmul.f32 %v138, %v161
    %v176 = vmul.f32 %v142, %v157
    %v177 = vmul.f32 %v142, %v161
    %v178 = vadd.f32 %v96, %v162
    %v179 = vadd.f32 %v97, %v163
    %v180 = vadd.f32 %v98, %v164
    %v181 = vadd.f32 %v99, %v165
    %v182 = vadd.f32 %v100, %v166
    %v183 = vadd.f32 %v101, %v167
    %v184 = vadd.f32 %v102, %v168
    %v185 = vadd.f32 %v103, %v169
    %v186 = vadd.f32 %v104, %v170
    %v187 = vadd.f32 %v105, %v171
    %v188 = vadd.f32 %v106, %v172
    %v189 = vadd.f32 %v107, %v173
    %v190 = vadd.f32 %v108, %v174
    %v191 = vadd.f32 %v109, %v175
    %v192 = vadd.f32 %v110, %v176
    %v193 = vadd.f32 %v111, %v177
    %194 = vset.pattern.permute.xlu0 2
    %195 = vperm.xlu0 %194, %v29
    %v196 = vpop.permute.xlu0 %195
    %198 = vset.pattern.permute.xlu0 2
    %199 = vperm.xlu0 %198, %v30
    %v200 = vpop.permute.xlu0 %199
    %202 = vset.pattern.permute.xlu0 2
    %203 = vperm.xlu0 %202, %v31
    %v204 = vpop.permute.xlu0 %203
    %206 = vset.pattern.permute.xlu0 2
    %207 = vperm.xlu0 %206, %v32
    %v208 = vpop.permute.xlu0 %207
    %210 = vset.pattern.permute.xlu0 2
    %211 = vperm.xlu0 %210, %v33
    %v212 = vpop.permute.xlu0 %211
    %214 = vset.pattern.permute.xlu0 2
    %215 = vperm.xlu0 %214, %v34
    %v216 = vpop.permute.xlu0 %215
    %218 = vset.pattern.permute.xlu0 2
    %219 = vperm.xlu0 %218, %v35
    %v220 = vpop.permute.xlu0 %219
    %222 = vset.pattern.permute.xlu0 2
    %223 = vperm.xlu0 %222, %v36
    %v224 = vpop.permute.xlu0 %223
    %v226 = vlaneseq
    %v227 = vshrl.u32 %v226, 7
    %v228 = vsub.s32 2, %v227
    %v229 = vrot.slane %v28, %v228
    %v230 = vlaneseq
    %v231 = vshrl.u32 %v230, 7
    %v232 = vsub.s32 6, %v231
    %v233 = vrot.slane %v28, %v232
    %v236 = vlaneseq
    %v237 = vshrl.u32 %v236, 7
    %v238 = vsub.s32 2, %v237
    %v239 = vrot.slane %v229, %v238
    %v240 = vlaneseq
    %v241 = vshrl.u32 %v240, 7
    %v242 = vsub.s32 2, %v241
    %v243 = vrot.slane %v233, %v242
    %v244 = vmul.f32 %v196, %v239
    %v245 = vmul.f32 %v196, %v243
    %v246 = vmul.f32 %v200, %v239
    %v247 = vmul.f32 %v200, %v243
    %v248 = vmul.f32 %v204, %v239
    %v249 = vmul.f32 %v204, %v243
    %v250 = vmul.f32 %v208, %v239
    %v251 = vmul.f32 %v208, %v243
    %v252 = vmul.f32 %v212, %v239
    %v253 = vmul.f32 %v212, %v243
    %v254 = vmul.f32 %v216, %v239
    %v255 = vmul.f32 %v216, %v243
    %v256 = vmul.f32 %v220, %v239
    %v257 = vmul.f32 %v220, %v243
    %v258 = vmul.f32 %v224, %v239
    %v259 = vmul.f32 %v224, %v243
    %v260 = vadd.f32 %v178, %v244
    %v261 = vadd.f32 %v179, %v245
    %v262 = vadd.f32 %v180, %v246
    %v263 = vadd.f32 %v181, %v247
    %v264 = vadd.f32 %v182, %v248
    %v265 = vadd.f32 %v183, %v249
    %v266 = vadd.f32 %v184, %v250
    %v267 = vadd.f32 %v185, %v251
    %v268 = vadd.f32 %v186, %v252
    %v269 = vadd.f32 %v187, %v253
    %v270 = vadd.f32 %v188, %v254
    %v271 = vadd.f32 %v189, %v255
    %v272 = vadd.f32 %v190, %v256
    %v273 = vadd.f32 %v191, %v257
    %v274 = vadd.f32 %v192, %v258
    %v275 = vadd.f32 %v193, %v259
    %v276 = vld [vmem:[%s2] sm:$0xff]
    %v277 = vld [vmem:[%s2 + $0x8] sm:$0xff]
    %v278 = vld [vmem:[%s2 + $0x10] sm:$0xff]
    %v279 = vld [vmem:[%s2 + $0x18] sm:$0xff]
    %v280 = vld [vmem:[%s2 + $0x20] sm:$0xff]
    %v281 = vld [vmem:[%s2 + $0x28] sm:$0xff]
    %v282 = vld [vmem:[%s2 + $0x30] sm:$0xff]
    %v283 = vld [vmem:[%s2 + $0x38] sm:$0xff]
    %285 = vset.pattern.permute.xlu0 0
    %286 = vperm.xlu0 %285, %v276
    %v287 = vpop.permute.xlu0 %286
    %290 = vset.pattern.permute.xlu0 0
    %291 = vperm.xlu0 %290, %v277
    %v292 = vpop.permute.xlu0 %291
    %295 = vset.pattern.permute.xlu0 0
    %296 = vperm.xlu0 %295, %v278
    %v297 = vpop.permute.xlu0 %296
    %300 = vset.pattern.permute.xlu0 0
    %301 = vperm.xlu0 %300, %v279
    %v302 = vpop.permute.xlu0 %301
    %305 = vset.pattern.permute.xlu0 0
    %306 = vperm.xlu0 %305, %v280
    %v307 = vpop.permute.xlu0 %306
    %310 = vset.pattern.permute.xlu0 0
    %311 = vperm.xlu0 %310, %v281
    %v312 = vpop.permute.xlu0 %311
    %315 = vset.pattern.permute.xlu0 0
    %316 = vperm.xlu0 %315, %v282
    %v317 = vpop.permute.xlu0 %316
    %320 = vset.pattern.permute.xlu0 0
    %321 = vperm.xlu0 %320, %v283
    %v322 = vpop.permute.xlu0 %321
    %v324 = vadd.f32 %v260, %v287
    %v325 = vadd.f32 %v261, %v287
    %v326 = vadd.f32 %v262, %v292
    %v327 = vadd.f32 %v263, %v292
    %v328 = vadd.f32 %v264, %v297
    %v329 = vadd.f32 %v265, %v297
    %v330 = vadd.f32 %v266, %v302
    %v331 = vadd.f32 %v267, %v302
    %v332 = vadd.f32 %v268, %v307
    %v333 = vadd.f32 %v269, %v307
    %v334 = vadd.f32 %v270, %v312
    %v335 = vadd.f32 %v271, %v312
    %v336 = vadd.f32 %v272, %v317
    %v337 = vadd.f32 %v273, %v317
    %v338 = vadd.f32 %v274, %v322
    %v339 = vadd.f32 %v275, %v322
    %v340 = vmax.f32 %v324, 0.0
    %v341 = vmax.f32 %v325, 0.0
    %v342 = vmax.f32 %v326, 0.0
    %v343 = vmax.f32 %v327, 0.0
    %v344 = vmax.f32 %v328, 0.0
    %v345 = vmax.f32 %v329, 0.0
    %v346 = vmax.f32 %v330, 0.0
    %v347 = vmax.f32 %v331, 0.0
    %v348 = vmax.f32 %v332, 0.0
    %v349 = vmax.f32 %v333, 0.0
    %v350 = vmax.f32 %v334, 0.0
    %v351 = vmax.f32 %v335, 0.0
    %v352 = vmax.f32 %v336, 0.0
    %v353 = vmax.f32 %v337, 0.0
    %v354 = vmax.f32 %v338, 0.0
    %v355 = vmax.f32 %v339, 0.0
    %v356 = vpack.c.bf16 %v342, %v340
    %v357 = vpack.c.bf16 %v343, %v341
    %v358 = vpack.c.bf16 %v346, %v344
    %v359 = vpack.c.bf16 %v347, %v345
    %v360 = vpack.c.bf16 %v350, %v348
    %v361 = vpack.c.bf16 %v351, %v349
    %v362 = vpack.c.bf16 %v354, %v352
    %v363 = vpack.c.bf16 %v355, %v353
    %v364 = vld [vmem:[%s3] sm:$0xf]
    %v365 = vld [vmem:[%s3 + $0x4] sm:$0xf]
    %v366 = vld [vmem:[%s3 + $0x8] sm:$0xf]
    %v367 = vld [vmem:[%s3 + $0xc] sm:$0xf]
    %v368 = vld [vmem:[%s3 + $0x10] sm:$0xf]
    %v369 = vld [vmem:[%s3 + $0x14] sm:$0xf]
    %v370 = vld [vmem:[%s3 + $0x18] sm:$0xf]
    %v371 = vld [vmem:[%s3 + $0x1c] sm:$0xf]
    %v372 = vld [vmem:[%s4] sm:$0xff]
    %v373 = vld [vmem:[%s4 + $0x8] sm:$0xff]
    %v374 = vld [vmem:[%s4 + $0x10] sm:$0xff]
    %v375 = vld [vmem:[%s4 + $0x18] sm:$0xff]
    %v376 = vld [vmem:[%s4 + $0x20] sm:$0xff]
    %v377 = vld [vmem:[%s4 + $0x28] sm:$0xff]
    %v378 = vld [vmem:[%s4 + $0x30] sm:$0xff]
    %v379 = vld [vmem:[%s4 + $0x38] sm:$0xff]
    %381 = vset.pattern.permute.xlu0 0
    %382 = vperm.xlu0 %381, %v372
    %v383 = vpop.permute.xlu0 %382
    %386 = vset.pattern.permute.xlu0 0
    %387 = vperm.xlu0 %386, %v373
    %v388 = vpop.permute.xlu0 %387
    %391 = vset.pattern.permute.xlu0 0
    %392 = vperm.xlu0 %391, %v374
    %v393 = vpop.permute.xlu0 %392
    %396 = vset.pattern.permute.xlu0 0
    %397 = vperm.xlu0 %396, %v375
    %v398 = vpop.permute.xlu0 %397
    %401 = vset.pattern.permute.xlu0 0
    %402 = vperm.xlu0 %401, %v376
    %v403 = vpop.permute.xlu0 %402
    %406 = vset.pattern.permute.xlu0 0
    %407 = vperm.xlu0 %406, %v377
    %v408 = vpop.permute.xlu0 %407
    %411 = vset.pattern.permute.xlu0 0
    %412 = vperm.xlu0 %411, %v378
    %v413 = vpop.permute.xlu0 %412
    %416 = vset.pattern.permute.xlu0 0
    %417 = vperm.xlu0 %416, %v379
    %v418 = vpop.permute.xlu0 %417
    %v428 = vunpack.c.l.b16 %v364
    %v429 = vunpack.c.l.b16 %v365
    %v430 = vunpack.c.l.b16 %v366
    %v431 = vunpack.c.l.b16 %v367
    %v432 = vunpack.c.l.b16 %v368
    %v433 = vunpack.c.l.b16 %v369
    %v434 = vunpack.c.l.b16 %v370
    %v435 = vunpack.c.l.b16 %v371
    %v436 = vpack.c.b16 %v429, %v428
    %v437 = vpack.c.b16 %v431, %v430
    %v438 = vpack.c.b16 %v433, %v432
    %v439 = vpack.c.b16 %v435, %v434
    %vm440 = vcmask 523264
    %v442 = vsel %vm440, %v436, 0
    %v445 = vsel %vm440, %v437, 0
    %v448 = vsel %vm440, %v438, 0
    %v451 = vsel %vm440, %v439, 0
    %453 = vmatprep.subr.bf16.mxu0 %v357
    %454 = vmatpush1.bf16.msra.mxu0 %v356
    %455 = vmatprep.subr.bf16.mxu0 %v359
    %456 = vmatpush1.bf16.msra.mxu0 %v358
    %457 = vmatprep.subr.bf16.mxu0 %v361
    %458 = vmatpush1.bf16.msra.mxu0 %v360
    %459 = vmatprep.subr.bf16.mxu0 %v363
    %460 = vmatpush1.bf16.msra.mxu0 %v362
    %461 = vmatprep.subr.bf16.mxu0 0
    %462 = vmatpush1.bf16.msra.mxu0 0
    %463 = vmatprep.subr.bf16.mxu0 0
    %464 = vmatpush1.bf16.msra.mxu0 0
    %465 = vmatprep.subr.bf16.mxu0 0
    %466 = vmatpush1.bf16.msra.mxu0 0
    %467 = vmatprep.subr.bf16.mxu0 0
    %468 = vmatpush1.bf16.msra.mxu0 0
    %469 = vmatprep.subr.bf16.mxu0 0
    %470 = vmatpush1.bf16.msra.mxu0 0
    %471 = vmatprep.subr.bf16.mxu0 0
    %472 = vmatpush1.bf16.msra.mxu0 0
    %473 = vmatprep.subr.bf16.mxu0 0
    %474 = vmatpush1.bf16.msra.mxu0 0
    %475 = vmatprep.subr.bf16.mxu0 0
    %476 = vmatpush1.bf16.msra.mxu0 0
    %477 = vmatprep.subr.bf16.mxu0 0
    %478 = vmatpush1.bf16.msra.mxu0 0
    %479 = vmatprep.subr.bf16.mxu0 0
    %480 = vmatpush1.bf16.msra.mxu0 0
    %481 = vmatprep.subr.bf16.mxu0 0
    %482 = vmatpush1.bf16.msra.mxu0 0
    %483 = vmatprep.subr.bf16.mxu0 0
    %484 = vmatpush1.bf16.msra.mxu0 0
    %485 = vmatprep.mubr.bf16.mxu0 0
    %486 = vmatmul.mubr.bf16.gmra.mrb[0].mxu0 %v442
    %v487 = vpop.f32.mrb[0].mxu0
    %v488 = vadd.f32 %v383, %v487
    %v489 = vpop.f32.mrb[0].mxu0
    %v490 = vadd.f32 %v383, %v489
    %v491 = vpop.f32.mrb[0].mxu0
    %v492 = vadd.f32 %v388, %v491
    %v493 = vpop.f32.mrb[0].mxu0
    %v494 = vadd.f32 %v388, %v493
    %495 = vmatprep.mubr.bf16.mxu0 0
    %496 = vmatmul.mubr.bf16.gmra.mrb[0].mxu0 %v445
    %v497 = vpop.f32.mrb[0].mxu0
    %v498 = vadd.f32 %v393, %v497
    %v499 = vpop.f32.mrb[0].mxu0
    %v500 = vadd.f32 %v393, %v499
    %v501 = vpop.f32.mrb[0].mxu0
    %v502 = vadd.f32 %v398, %v501
    %v503 = vpop.f32.mrb[0].mxu0
    %v504 = vadd.f32 %v398, %v503
    %505 = vmatprep.mubr.bf16.mxu0 0
    %506 = vmatmul.mubr.bf16.gmra.mrb[0].mxu0 %v448
    %v507 = vpop.f32.mrb[0].mxu0
    %v508 = vadd.f32 %v403, %v507
    %v509 = vpop.f32.mrb[0].mxu0
    %v510 = vadd.f32 %v403, %v509
    %v511 = vpop.f32.mrb[0].mxu0
    %v512 = vadd.f32 %v408, %v511
    %v513 = vpop.f32.mrb[0].mxu0
    %v514 = vadd.f32 %v408, %v513
    %515 = vmatprep.mubr.bf16.mxu0 0
    %516 = vmatmul.mubr.bf16.gmra.mrb[0].mxu0 %v451
    %v517 = vpop.f32.mrb[0].mxu0
    %v518 = vadd.f32 %v413, %v517
    %v519 = vpop.f32.mrb[0].mxu0
    %v520 = vadd.f32 %v413, %v519
    %v521 = vpop.f32.mrb[0].mxu0
    %v522 = vadd.f32 %v418, %v521
    %v523 = vpop.f32.mrb[0].mxu0
    %v524 = vadd.f32 %v418, %v523
    %525 = vdwg.mxu0
    %v526 = vmax.f32 %v488, 0.0
    %v527 = vmax.f32 %v490, 0.0
    %v528 = vmax.f32 %v492, 0.0
    %v529 = vmax.f32 %v494, 0.0
    %v530 = vmax.f32 %v498, 0.0
    %v531 = vmax.f32 %v500, 0.0
    %v532 = vmax.f32 %v502, 0.0
    %v533 = vmax.f32 %v504, 0.0
    %v534 = vmax.f32 %v508, 0.0
    %v535 = vmax.f32 %v510, 0.0
    %v536 = vmax.f32 %v512, 0.0
    %v537 = vmax.f32 %v514, 0.0
    %v538 = vmax.f32 %v518, 0.0
    %v539 = vmax.f32 %v520, 0.0
    %v540 = vmax.f32 %v522, 0.0
    %v541 = vmax.f32 %v524, 0.0
    %v542 = vpack.c.bf16 %v528, %v526
    %v543 = vpack.c.bf16 %v529, %v527
    %v544 = vpack.c.bf16 %v532, %v530
    %v545 = vpack.c.bf16 %v533, %v531
    %v546 = vpack.c.bf16 %v536, %v534
    %v547 = vpack.c.bf16 %v537, %v535
    %v548 = vpack.c.bf16 %v540, %v538
    %v549 = vpack.c.bf16 %v541, %v539
    %s550 = scalar_lea.vmem %s3, 32
    %v551 = vld [vmem:[%s550] sm:$0xf]
    %v552 = vld [vmem:[%s550 + $0x4] sm:$0xf]
    %v553 = vld [vmem:[%s550 + $0x8] sm:$0xf]
    %v554 = vld [vmem:[%s550 + $0xc] sm:$0xf]
    %v555 = vld [vmem:[%s550 + $0x10] sm:$0xf]
    %v556 = vld [vmem:[%s550 + $0x14] sm:$0xf]
    %v557 = vld [vmem:[%s550 + $0x18] sm:$0xf]
    %v558 = vld [vmem:[%s550 + $0x1c] sm:$0xf]
    %s559 = scalar_lea.vmem %s4, 64
    %v560 = vld [vmem:[%s559] sm:$0xff]
    %v561 = vld [vmem:[%s559 + $0x8] sm:$0xff]
    %v562 = vld [vmem:[%s559 + $0x10] sm:$0xff]
    %v563 = vld [vmem:[%s559 + $0x18] sm:$0xff]
    %v564 = vld [vmem:[%s559 + $0x20] sm:$0xff]
    %v565 = vld [vmem:[%s559 + $0x28] sm:$0xff]
    %v566 = vld [vmem:[%s559 + $0x30] sm:$0xff]
    %v567 = vld [vmem:[%s559 + $0x38] sm:$0xff]
    %569 = vset.pattern.permute.xlu0 0
    %570 = vperm.xlu0 %569, %v560
    %v571 = vpop.permute.xlu0 %570
    %574 = vset.pattern.permute.xlu0 0
    %575 = vperm.xlu0 %574, %v561
    %v576 = vpop.permute.xlu0 %575
    %579 = vset.pattern.permute.xlu0 0
    %580 = vperm.xlu0 %579, %v562
    %v581 = vpop.permute.xlu0 %580
    %584 = vset.pattern.permute.xlu0 0
    %585 = vperm.xlu0 %584, %v563
    %v586 = vpop.permute.xlu0 %585
    %589 = vset.pattern.permute.xlu0 0
    %590 = vperm.xlu0 %589, %v564
    %v591 = vpop.permute.xlu0 %590
    %594 = vset.pattern.permute.xlu0 0
    %595 = vperm.xlu0 %594, %v565
    %v596 = vpop.permute.xlu0 %595
    %599 = vset.pattern.permute.xlu0 0
    %600 = vperm.xlu0 %599, %v566
    %v601 = vpop.permute.xlu0 %600
    %604 = vset.pattern.permute.xlu0 0
    %605 = vperm.xlu0 %604, %v567
    %v606 = vpop.permute.xlu0 %605
    %v616 = vunpack.c.l.b16 %v551
    %v617 = vunpack.c.l.b16 %v552
    %v618 = vunpack.c.l.b16 %v553
    %v619 = vunpack.c.l.b16 %v554
    %v620 = vunpack.c.l.b16 %v555
    %v621 = vunpack.c.l.b16 %v556
    %v622 = vunpack.c.l.b16 %v557
    %v623 = vunpack.c.l.b16 %v558
    %v624 = vpack.c.b16 %v617, %v616
    %v625 = vpack.c.b16 %v619, %v618
    %v626 = vpack.c.b16 %v621, %v620
    %v627 = vpack.c.b16 %v623, %v622
    %v629 = vsel %vm440, %v624, 0
    %v632 = vsel %vm440, %v625, 0
    %v635 = vsel %vm440, %v626, 0
    %v638 = vsel %vm440, %v627, 0
    %640 = vmatprep.subr.bf16.mxu0 %v543
    %641 = vmatpush1.bf16.msra.mxu0 %v542
    %642 = vmatprep.subr.bf16.mxu0 %v545
    %643 = vmatpush1.bf16.msra.mxu0 %v544
    %644 = vmatprep.subr.bf16.mxu0 %v547
    %645 = vmatpush1.bf16.msra.mxu0 %v546
    %646 = vmatprep.subr.bf16.mxu0 %v549
    %647 = vmatpush1.bf16.msra.mxu0 %v548
    %648 = vmatprep.subr.bf16.mxu0 0
    %649 = vmatpush1.bf16.msra.mxu0 0
    %650 = vmatprep.subr.bf16.mxu0 0
    %651 = vmatpush1.bf16.msra.mxu0 0
    %652 = vmatprep.subr.bf16.mxu0 0
    %653 = vmatpush1.bf16.msra.mxu0 0
    %654 = vmatprep.subr.bf16.mxu0 0
    %655 = vmatpush1.bf16.msra.mxu0 0
    %656 = vmatprep.subr.bf16.mxu0 0
    %657 = vmatpush1.bf16.msra.mxu0 0
    %658 = vmatprep.subr.bf16.mxu0 0
    %659 = vmatpush1.bf16.msra.mxu0 0
    %660 = vmatprep.subr.bf16.mxu0 0
    %661 = vmatpush1.bf16.msra.mxu0 0
    %662 = vmatprep.subr.bf16.mxu0 0
    %663 = vmatpush1.bf16.msra.mxu0 0
    %664 = vmatprep.subr.bf16.mxu0 0
    %665 = vmatpush1.bf16.msra.mxu0 0
    %666 = vmatprep.subr.bf16.mxu0 0
    %667 = vmatpush1.bf16.msra.mxu0 0
    %668 = vmatprep.subr.bf16.mxu0 0
    %669 = vmatpush1.bf16.msra.mxu0 0
    %670 = vmatprep.subr.bf16.mxu0 0
    %671 = vmatpush1.bf16.msra.mxu0 0
    %672 = vmatprep.mubr.bf16.mxu0 0
    %673 = vmatmul.mubr.bf16.gmra.mrb[0].mxu0 %v629
    %v674 = vpop.f32.mrb[0].mxu0
    %v675 = vadd.f32 %v571, %v674
    %v676 = vpop.f32.mrb[0].mxu0
    %v677 = vadd.f32 %v571, %v676
    %v678 = vpop.f32.mrb[0].mxu0
    %v679 = vadd.f32 %v576, %v678
    %v680 = vpop.f32.mrb[0].mxu0
    %v681 = vadd.f32 %v576, %v680
    %682 = vmatprep.mubr.bf16.mxu0 0
    %683 = vmatmul.mubr.bf16.gmra.mrb[0].mxu0 %v632
    %v684 = vpop.f32.mrb[0].mxu0
    %v685 = vadd.f32 %v581, %v684
    %v686 = vpop.f32.mrb[0].mxu0
    %v687 = vadd.f32 %v581, %v686
    %v688 = vpop.f32.mrb[0].mxu0
    %v689 = vadd.f32 %v586, %v688
    %v690 = vpop.f32.mrb[0].mxu0
    %v691 = vadd.f32 %v586, %v690
    %692 = vmatprep.mubr.bf16.mxu0 0
    %693 = vmatmul.mubr.bf16.gmra.mrb[0].mxu0 %v635
    %v694 = vpop.f32.mrb[0].mxu0
    %v695 = vadd.f32 %v591, %v694
    %v696 = vpop.f32.mrb[0].mxu0
    %v697 = vadd.f32 %v591, %v696
    %v698 = vpop.f32.mrb[0].mxu0
    %v699 = vadd.f32 %v596, %v698
    %v700 = vpop.f32.mrb[0].mxu0
    %v701 = vadd.f32 %v596, %v700
    %702 = vmatprep.mubr.bf16.mxu0 0
    %703 = vmatmul.mubr.bf16.gmra.mrb[0].mxu0 %v638
    %v704 = vpop.f32.mrb[0].mxu0
    %v705 = vadd.f32 %v601, %v704
    %v706 = vpop.f32.mrb[0].mxu0
    %v707 = vadd.f32 %v601, %v706
    %v708 = vpop.f32.mrb[0].mxu0
    %v709 = vadd.f32 %v606, %v708
    %v710 = vpop.f32.mrb[0].mxu0
    %v711 = vadd.f32 %v606, %v710
    %712 = vdwg.mxu0
    %v713 = vmax.f32 %v675, 0.0
    %v714 = vmax.f32 %v677, 0.0
    %v715 = vmax.f32 %v679, 0.0
    %v716 = vmax.f32 %v681, 0.0
    %v717 = vmax.f32 %v685, 0.0
    %v718 = vmax.f32 %v687, 0.0
    %v719 = vmax.f32 %v689, 0.0
    %v720 = vmax.f32 %v691, 0.0
    %v721 = vmax.f32 %v695, 0.0
    %v722 = vmax.f32 %v697, 0.0
    %v723 = vmax.f32 %v699, 0.0
    %v724 = vmax.f32 %v701, 0.0
    %v725 = vmax.f32 %v705, 0.0
    %v726 = vmax.f32 %v707, 0.0
    %v727 = vmax.f32 %v709, 0.0
    %v728 = vmax.f32 %v711, 0.0
    %v729 = vpack.c.bf16 %v715, %v713
    %v730 = vpack.c.bf16 %v716, %v714
    %v731 = vpack.c.bf16 %v719, %v717
    %v732 = vpack.c.bf16 %v720, %v718
    %v733 = vpack.c.bf16 %v723, %v721
    %v734 = vpack.c.bf16 %v724, %v722
    %v735 = vpack.c.bf16 %v727, %v725
    %v736 = vpack.c.bf16 %v728, %v726
    %v737 = vld [vmem:[%s5] sm:$0xf]
    %v738 = vld [vmem:[%s6] sm:$0xff]
    %740 = vset.pattern.permute.xlu0 0
    %741 = vperm.xlu0 %740, %v738
    %v742 = vpop.permute.xlu0 %741
    %v745 = vsel %vm440, %v737, 0
    %747 = vmatprep.subr.bf16.mxu0 %v730
    %748 = vmatpush1.bf16.msra.mxu0 %v729
    %749 = vmatprep.subr.bf16.mxu0 %v732
    %750 = vmatpush1.bf16.msra.mxu0 %v731
    %751 = vmatprep.subr.bf16.mxu0 %v734
    %752 = vmatpush1.bf16.msra.mxu0 %v733
    %753 = vmatprep.subr.bf16.mxu0 %v736
    %754 = vmatpush1.bf16.msra.mxu0 %v735
    %755 = vmatprep.subr.bf16.mxu0 0
    %756 = vmatpush1.bf16.msra.mxu0 0
    %757 = vmatprep.subr.bf16.mxu0 0
    %758 = vmatpush1.bf16.msra.mxu0 0
    %759 = vmatprep.subr.bf16.mxu0 0
    %760 = vmatpush1.bf16.msra.mxu0 0
    %761 = vmatprep.subr.bf16.mxu0 0
    %762 = vmatpush1.bf16.msra.mxu0 0
    %763 = vmatprep.subr.bf16.mxu0 0
    %764 = vmatpush1.bf16.msra.mxu0 0
    %765 = vmatprep.subr.bf16.mxu0 0
    %766 = vmatpush1.bf16.msra.mxu0 0
    %767 = vmatprep.subr.bf16.mxu0 0
    %768 = vmatpush1.bf16.msra.mxu0 0
    %769 = vmatprep.subr.bf16.mxu0 0
    %770 = vmatpush1.bf16.msra.mxu0 0
    %771 = vmatprep.subr.bf16.mxu0 0
    %772 = vmatpush1.bf16.msra.mxu0 0
    %773 = vmatprep.subr.bf16.mxu0 0
    %774 = vmatpush1.bf16.msra.mxu0 0
    %775 = vmatprep.subr.bf16.mxu0 0
    %776 = vmatpush1.bf16.msra.mxu0 0
    %777 = vmatprep.subr.bf16.mxu0 0
    %778 = vmatpush1.bf16.msra.mxu0 0
    %779 = vmatprep.mubr.bf16.mxu0 0
    %780 = vmatmul.mubr.bf16.gmra.mrb[0].mxu0 %v745
    %v781 = vpop.f32.mrb[0].mxu0
    %v782 = vadd.f32 %v742, %v781
    %v783 = vpop.f32.mrb[0].mxu0
    %v784 = vadd.f32 %v742, %v783
    %v785 = vpop.f32.mrb[0].mxu0
    %v786 = vpop.f32.mrb[0].mxu0
    %787 = vdwg.mxu0
    %v788 = vmax.f32 %v782, 0.0
    %v789 = vmax.f32 %v784, 0.0
    %790 = vst [vmem:[#allocation2] sm:$0xff] %v788
    %791 = vst [vmem:[#allocation2 + $0x8] sm:$0xff] %v789
    // Predicated region
    $region30: #{tpu_custom_call.1} parent=1 // pred_check
      _
    $region31: #{tpu_custom_call.1} parent=1 // pred_check_branch
      %793 = sbr.rel (0) target = $region33
    $region32: #{tpu_custom_call.1} parent=1 // pred_region
      %s795 = ssub.s32 256, 256
      %796 = vsyncadd [#allocation3], %s795
      %s798 = sshll.u32 [#allocation2], 4
      %s799 = int_to_ptr.vmem [resolvable:$true] %s798
      %801 = dma.vmem_to_hbm [thread:$0]  %s799, 256, %s7, [#allocation3]
    $region33: #{tpu_custom_call.1} parent=1 // pred_fallthru
      _
    // Predicated region
    $region34: #{tpu_custom_call.1} parent=1 // pred_check
      _
    $region35: #{tpu_custom_call.1} parent=1 // pred_check_branch
      %803 = sbr.rel (0) target = $region37
    $region36: #{tpu_custom_call.1} parent=1 // pred_region
      %804 = dma.done [#allocation3], 256
    $region37: #{tpu_custom_call.1} parent=1 // pred_fallthru
      _
    %805 = vsyncpa [#allocation3], 1

</llo_original>
